<compile_context>
chip_gen: v5e
topology: v5e:2x2
jax: 0.10.0
libtpu: 0.0.40
codegen_flags: <defaults>
</compile_context>

<pallas_src>
import math

import jax
import jax.numpy as jnp
from jax.experimental import pallas as pl
from jax.experimental.pallas import tpu as pltpu


def _round_up(x, m):
    return (x + m - 1) // m * m


def _im2col_matmul_kernel(p_ref, w_ref, o_ref):
    # p_ref : (1, TM, Kc)        bf16  im2col activation patches for TM output pixels
    # w_ref : (Kc, COUT_pad)     bf16  pre-quantized effective weights (grid-invariant)
    # o_ref : (1, TM, COUT_pad)  bf16  lane-dense output tile
    o_ref[0, :, :] = jnp.dot(
        p_ref[0, :, :], w_ref[...],
        preferred_element_type=jnp.float32,
    ).astype(o_ref.dtype)


def qconv2d_forward(x_nchw, weight_oihw, e, b):
    """x: (N, Cin, H, W); weight: (Cout, Cin, KH, KW); e, b: (Cout, 1, 1, 1)."""
    N, CIN, H, W = x_nchw.shape
    COUT, _, KH, KW = weight_oihw.shape
    HO, WO = H - KH + 1, W - KW + 1
    Kc = KH * KW * CIN

    # ---- weight quantization hoisted out of the kernel (f32 elementwise) ----
    w32 = weight_oihw.astype(jnp.float32)
    e32 = e.astype(jnp.float32)
    b32 = b.astype(jnp.float32)
    relu_b = jnp.maximum(b32, 0.0)
    lim = jnp.exp2(relu_b - 1.0)
    qw = jnp.minimum(jnp.maximum(jnp.exp2(-e32) * w32, -lim), lim - 1.0)
    w_ste = (jnp.round(qw) - qw) + qw            # STE forward value == round(qw)
    eff_w = jnp.exp2(e32) * w_ste                # (COUT, CIN, KH, KW), f32

    # ---- tiling choices ----
    # Lane-dense output: COUT padded to 128 (native v5e MXU width); 256-multiples
    # when COUT is large enough to fill the 2x256 MXUs on v6e/v7x.
    COUT_pad = 128 if COUT <= 128 else _round_up(COUT, 256)
    P = HO * WO                                  # output pixels per image
    TM = min(_round_up(P, 16), 512)              # ~512 output pixels per grid step
    P_pad = _round_up(P, TM)
    NT = P_pad // TM

    # ---- activations: NCHW -> NHWC, bf16 once, im2col to (N, P_pad, Kc) ----
    xb = jnp.transpose(x_nchw.astype(jnp.float32), (0, 2, 3, 1)).astype(jnp.bfloat16)
    taps = [xb[:, kh:kh + HO, kw:kw + WO, :]     # each (N, HO, WO, CIN)
            for kh in range(KH) for kw in range(KW)]
    patches = jnp.concatenate(taps, axis=-1).reshape(N, P, Kc)
    patches = jnp.pad(patches, ((0, 0), (0, P_pad - P), (0, 0)))

    # ---- weights: OIHW -> (Kc, COUT_pad) bf16, row order (kh, kw, cin) ----
    w2 = jnp.transpose(eff_w, (2, 3, 1, 0)).reshape(Kc, COUT)
    w2 = jnp.pad(w2, ((0, 0), (0, COUT_pad - COUT))).astype(jnp.bfloat16)

    # NOTE: the weight block is grid-invariant; at production sizes it could be
    # single-buffered (pipeline_mode=pl.Buffered(1)) to reclaim VMEM — here it is
    # ~9 KB so the default double-buffering is free.
    out = pl.pallas_call(
        _im2col_matmul_kernel,
        out_shape=jax.ShapeDtypeStruct((N, P_pad, COUT_pad), jnp.bfloat16),
        grid=(N, NT),
        in_specs=[
            pl.BlockSpec((1, TM, Kc), lambda n, i: (n, i, 0)),
            pl.BlockSpec((Kc, COUT_pad), lambda n, i: (0, 0)),
        ],
        out_specs=pl.BlockSpec((1, TM, COUT_pad), lambda n, i: (n, i, 0)),
        compiler_params=pltpu.CompilerParams(
            dimension_semantics=("parallel", "parallel"),
            vmem_limit_bytes=32 * 1024 * 1024),
    )(patches, w2)

    # Layout plumbing back to f32 NCHW: drop padding, unflatten, transpose.
    out = out[:, :P, :COUT].reshape(N, HO, WO, COUT).astype(jnp.float32)
    return jnp.transpose(out, (0, 3, 1, 2))


if __name__ == "__main__":
    key = jax.random.PRNGKey(0)
    k_x, k_w = jax.random.split(key)

    # Small shapes consistent with the module (batch=2, in=4, out=8, 16x16, k=3).
    N, CIN, COUT, H, W = 2, 4, 8, 16, 16
    KH = KW = 3

    # Deterministic parameter init mirroring __init__:
    #   weight ~ U(-scale, scale), e = -8.0, b = 2.0
    scale = 1.0 / math.sqrt(CIN * KH * KW)
    weight = jax.random.uniform(k_w, (COUT, CIN, KH, KW), jnp.float32,
                                minval=-scale, maxval=scale)
    e = jnp.full((COUT, 1, 1, 1), -8.0, jnp.float32)
    b = jnp.full((COUT, 1, 1, 1), 2.0, jnp.float32)

    x = jax.random.normal(k_x, (N, CIN, H, W), dtype=jnp.float32)

    out = jax.jit(qconv2d_forward)(x, weight, e, b)
    out = jax.block_until_ready(out)

    # Pure-JAX f32 reference (module semantics).
    relu_b = jnp.maximum(b, 0.0)
    lim = jnp.exp2(relu_b - 1.0)
    qw = jnp.minimum(jnp.maximum(jnp.exp2(-e) * weight, -lim), lim - 1.0)
    w_ste = (jnp.round(qw) - qw) + qw
    eff_w = jnp.exp2(e) * w_ste
    ref = jax.lax.conv_general_dilated(
        x, eff_w, window_strides=(1, 1), padding="VALID",
        dimension_numbers=("NCHW", "OIHW", "NCHW"))

    assert out.shape == (N, COUT, H - KH + 1, W - KW + 1), out.shape
    # bf16 MXU operands / bf16 activations & outputs, f32 accumulation.
    max_err = float(jnp.max(jnp.abs(out - ref)))
    assert max_err < 1e-2, max_err
    print("KERNEL_OK")
</pallas_src>

<mosaic_0001>
module attributes {stable_mosaic.version = 11 : i64} {
  func.func @_im2col_matmul_kernel(%arg0: i32, %arg1: i32, %arg2: memref<1x208x36xbf16, #tpu.memory_space<vmem>>, %arg3: memref<36x128xbf16, #tpu.memory_space<vmem>>, %arg4: memref<1x208x128xbf16, #tpu.memory_space<vmem>>) attributes {dimension_semantics = [#tpu.dimension_semantics<parallel>, #tpu.dimension_semantics<parallel>], iteration_bounds = array<i64: 2, 1>, scalar_prefetch = 0 : i64, scratch_operands = 0 : i64, tpu.core_type = #tpu.core_type<tc>, window_params = [{transform_indices = @transform_0, window_bounds = array<i64: 1, 208, 36>}, {pipeline_mode = #tpu.pipeline_mode<synchronous>, transform_indices = @transform_1, window_bounds = array<i64: 36, 128>}, {transform_indices = @transform_2, window_bounds = array<i64: 1, 208, 128>}]} {
    %c0 = arith.constant 0 : index
    %c0_0 = arith.constant 0 : index
    %c0_1 = arith.constant 0 : index
    %0 = vector.load %arg2[%c0, %c0_0, %c0_1] : memref<1x208x36xbf16, #tpu.memory_space<vmem>>, vector<1x208x36xbf16>
    %1 = vector.shape_cast %0 : vector<1x208x36xbf16> to vector<208x36xbf16>
    %c0_2 = arith.constant 0 : index
    %c0_3 = arith.constant 0 : index
    %2 = vector.load %arg3[%c0_2, %c0_3] : memref<36x128xbf16, #tpu.memory_space<vmem>>, vector<36x128xbf16>
    %cst = arith.constant dense<0.000000e+00> : vector<208x128xf32>
    %3 = tpu.matmul %1, %2, %cst {dimension_numbers = #tpu.dot_dimension_numbers<[1], [0], [0], [1], [0, 0, 1, 1], [], []>} : vector<208x36xbf16>, vector<36x128xbf16>, vector<208x128xf32> -> vector<208x128xf32>
    %4 = arith.truncf %3 : vector<208x128xf32> to vector<208x128xbf16>
    %c0_4 = arith.constant 0 : index
    %c0_5 = arith.constant 0 : index
    %c0_6 = arith.constant 0 : index
    %5 = vector.load %arg4[%c0_4, %c0_5, %c0_6] : memref<1x208x128xbf16, #tpu.memory_space<vmem>>, vector<1x208x128xbf16>
    %6 = vector.shape_cast %5 : vector<1x208x128xbf16> to vector<208x128xbf16>
    %7 = vector.shape_cast %4 : vector<208x128xbf16> to vector<1x208x128xbf16>
    tpu.vector_store %arg4[%c0_4, %c0_5, %c0_6], %7 {strides = array<i32>} : memref<1x208x128xbf16, #tpu.memory_space<vmem>>, vector<1x208x128xbf16>,
    return
  }
  func.func @transform_0(%arg0: i32, %arg1: i32) -> (i32, i32, i32) {
    %c0_i32 = arith.constant 0 : i32
    %c0_i32_0 = arith.constant 0 : i32
    return %arg0, %arg1, %c0_i32 : i32, i32, i32
  }
  func.func @transform_1(%arg0: i32, %arg1: i32) -> (i32, i32) {
    %c0_i32 = arith.constant 0 : i32
    %c0_i32_0 = arith.constant 0 : i32
    %c0_i32_1 = arith.constant 0 : i32
    return %c0_i32, %c0_i32_0 : i32, i32
  }
  func.func @transform_2(%arg0: i32, %arg1: i32) -> (i32, i32, i32) {
    %c0_i32 = arith.constant 0 : i32
    %c0_i32_0 = arith.constant 0 : i32
    return %arg0, %arg1, %c0_i32 : i32, i32, i32
  }
}

</mosaic_0001>

<llo_original>
// kernel: qconv2d_forward.1
$region0: #{qconv2d_forward.1}
  #allocation0 [shape = 'u32[]', space=smem, size = 0x4, offset = 0x4, fixed_abs, tag = 'smem constant byte address 0x4 - core index']
  #allocation1 [shape = 'u32[72,128]{1,0:T(1,128)}', space=vmem, size = 0x9000, scoped, tag = 'internal scratch']
  %s0 = inlined_call_operand.vmem [shape: bf16[2,208,36], index: 0, kind: input, shape index: {}]
  %s1 = inlined_call_operand.vmem [shape: bf16[36,128], index: 1, kind: input, shape index: {}]
  %s2 = inlined_call_operand.vmem [shape: bf16[2,208,128], index: 2, kind: output, shape index: {}]
  %s3 = sld [smem:[#allocation0]]
  $region41: #{qconv2d_forward.1} parent=0
    _
  %s5 = ssub.s32 1, %s3
  %s6 = scalar_select 0, %s5, %s3
  loop: start=0, step=1, limit=4
  $region2: #{qconv2d_forward.1} parent=0 // loop_pre_header
    _
  $region3: #{qconv2d_forward.1} parent=0 // loop_header
    %s8 = sphi 0, %s12
    %p9 = scmp.ge.s32.totalorder %s8, 4
    %s15 = sphi 0, %s27
    %s16 = sphi 0, %s23
    %s17 = sphi 0, %s15
    %s18 = sphi 0, %s16
    %s19 = sphi 0, %s17
    %s20 = sphi 0, %s18
    %s32 = sphi 0, %s34
    %s35 = sphi 0, %s32
    %s36 = sphi 0, %s35
    %s52 = sphi 0, %s36
    %s56 = sphi 0, %s56
    %s58 = sphi 0, %s56
    %s59 = sphi 0, %s58
    %s73 = sphi 0, %s59
    %s81 = sphi 0, %s83
    %s84 = sphi 0, %s81
    %s85 = sphi 0, %s84
    %s101 = sphi 0, %s85
  $region4: #{qconv2d_forward.1} parent=0 // loop_header_branch
    %11 = sbr.rel (%p9) target = $region8
  $region5: #{qconv2d_forward.1} parent=0 // loop_body
    %s13 = ssub.s32 %s8, 1
    %s14 = ssub.s32 %s8, 2
    %s21 = sadd.s32 1, %s16
    %p22 = scmp.ge.s32.totalorder %s21, 1
    %s23 = scalar_select %p22, 0, %s21
    %s24 = sadd.s32 1, %s15
    %s25 = scalar_select %p22, %s24, %s15
    %p26 = scmp.ge.s32.totalorder %s25, 2
    %s27 = scalar_select %p26, 0, %s25
    %s28 = ssub.s32 %s15, %s27
    %s29 = ssub.s32 %s16, %s23
    %s30 = sor.u32 %s28, %s29
    %p31 = scmp.eq.s32.totalorder %s30, 0
    %s33 = sadd.s32 %s32, 1
    %s34 = scalar_select %p31, %s32, %s33
    %p37 = pneg %p31
    %p38 = scmp.eq.s32.totalorder %s8, 1
    %p39 = por %p37, %p38
    %p40 = scmp.ne.s32.totalorder %s32, %s35
    %p41 = scmp.eq.s32.totalorder %s8, 0
    %p42 = por %p40, %p41
    %p43 = scmp.ne.s32.totalorder %s32, %s35
    %p44 = scmp.eq.s32.totalorder %s13, 1
    %p45 = por %p43, %p44
    %p46 = scmp.ne.s32.totalorder %s35, %s36
    %p47 = scmp.eq.s32.totalorder %s13, 0
    %p48 = por %p46, %p47
    %p49 = scmp.ne.s32.totalorder %s35, %s36
    %p50 = scmp.eq.s32.totalorder %s14, 1
    %p51 = por %p49, %p50
    %p53 = scmp.ne.s32.totalorder %s36, %s52
    %p54 = scmp.eq.s32.totalorder %s14, 0
    %p55 = por %p53, %p54
    %s57 = sadd.s32 %s56, 1
    %p60 = scmp.eq.s32.totalorder %s8, 1
    %p61 = scmp.ne.s32.totalorder %s56, %s58
    %p62 = scmp.eq.s32.totalorder %s8, 0
    %p63 = por %p61, %p62
    %p64 = scmp.ne.s32.totalorder %s56, %s58
    %p65 = scmp.eq.s32.totalorder %s13, 1
    %p66 = por %p64, %p65
    %p67 = scmp.ne.s32.totalorder %s58, %s59
    %p68 = scmp.eq.s32.totalorder %s13, 0
    %p69 = por %p67, %p68
    %p70 = scmp.ne.s32.totalorder %s58, %s59
    %p71 = scmp.eq.s32.totalorder %s14, 1
    %p72 = por %p70, %p71
    %p74 = scmp.ne.s32.totalorder %s59, %s73
    %p75 = scmp.eq.s32.totalorder %s14, 0
    %p76 = por %p74, %p75
    %s77 = ssub.s32 %s15, %s27
    %s78 = ssub.s32 %s16, %s23
    %s79 = sor.u32 %s77, %s78
    %p80 = scmp.eq.s32.totalorder %s79, 0
    %s82 = sadd.s32 %s81, 1
    %s83 = scalar_select %p80, %s81, %s82
    %p86 = pneg %p80
    %p87 = scmp.eq.s32.totalorder %s8, 1
    %p88 = por %p86, %p87
    %p89 = scmp.ne.s32.totalorder %s81, %s84
    %p90 = scmp.eq.s32.totalorder %s8, 0
    %p91 = por %p89, %p90
    %p92 = scmp.ne.s32.totalorder %s81, %s84
    %p93 = scmp.eq.s32.totalorder %s13, 1
    %p94 = por %p92, %p93
    %p95 = scmp.ne.s32.totalorder %s84, %s85
    %p96 = scmp.eq.s32.totalorder %s13, 0
    %p97 = por %p95, %p96
    %p98 = scmp.ne.s32.totalorder %s84, %s85
    %p99 = scmp.eq.s32.totalorder %s14, 1
    %p100 = por %p98, %p99
    %p102 = scmp.ne.s32.totalorder %s85, %s101
    %p103 = scmp.eq.s32.totalorder %s14, 0
    %p104 = por %p102, %p103
    %p105 = scmp.le.s32.totalorder 1, %s8
    %p106 = scmp.lt.s32.totalorder %s8, 3
    %p107 = pnand %p105, %p106
    %p108 = pneg %p107
    // Predicated region
    $region9: #{qconv2d_forward.1} parent=5 // pred_check
      _
    $region10: #{qconv2d_forward.1} parent=5 // pred_check_branch
      %110 = sbr.rel (%p107) target = $region12
    $region11: #{qconv2d_forward.1} parent=5 // pred_region
      %s111 = ssub.s32 %s8, 1
      // Predicated region
      $region13: #{qconv2d_forward.1} parent=11 // pred_check
        %p112 = pneg %p69
      $region14: #{qconv2d_forward.1} parent=11 // pred_check_branch
        %114 = sbr.rel (%p112) target = $region16
      $region15: #{qconv2d_forward.1} parent=11 // pred_region
        _
      $region16: #{qconv2d_forward.1} parent=11 // pred_fallthru
        _
    $region12: #{qconv2d_forward.1} parent=5 // pred_fallthru
      _
    %p115 = scmp.lt.s32.totalorder %s8, 2
    // Predicated region
    $region17: #{qconv2d_forward.1} parent=5 // pred_check
      %p116 = pneg %p115
    $region18: #{qconv2d_forward.1} parent=5 // pred_check_branch
      %118 = sbr.rel (%p116) target = $region20
    $region19: #{qconv2d_forward.1} parent=5 // pred_region
      // Predicated region
      $region21: #{qconv2d_forward.1} parent=19 // pred_check
        %p119 = pneg %p42
      $region22: #{qconv2d_forward.1} parent=19 // pred_check_branch
        %121 = sbr.rel (%p119) target = $region24
      $region23: #{qconv2d_forward.1} parent=19 // pred_region
        %s122 = smul.u32 26, %s16
        %p123 = scmp.lt.s32.totalorder %s15, 1
        %s124 = scalar_select %p123, %s15, 1
        %p125 = scmp.lt.s32.totalorder %s122, 25
        %s126 = scalar_select %p125, %s122, 25
        %s127 = smul.addr %s124, 26
        %s128 = sadd.s32 %s126, %s127
        %s129 = smul.addr %s128, 4
        %s130 = scalar_lea.vmem %s0, %s129
        %s131 = smul.u32 26, %s16
      $region24: #{qconv2d_forward.1} parent=19 // pred_fallthru
        _
    $region20: #{qconv2d_forward.1} parent=5 // pred_fallthru
      _
    %p132 = scmp.le.s32.totalorder 1, %s8
    %p133 = scmp.lt.s32.totalorder %s8, 3
    %p134 = pnand %p132, %p133
    %p135 = pneg %p134
    // Predicated region
    $region25: #{qconv2d_forward.1} parent=5 // pred_check
      _
    $region26: #{qconv2d_forward.1} parent=5 // pred_check_branch
      %137 = sbr.rel (%p134) target = $region28
    $region27: #{qconv2d_forward.1} parent=5 // pred_region
      %s138 = ssub.s32 %s8, 1
      %s139 = smul.u32 26, %s18
      %p140 = scmp.lt.s32.totalorder %s17, 1
      %s141 = scalar_select %p140, %s17, 1
      %p142 = scmp.lt.s32.totalorder %s139, 25
      %s143 = scalar_select %p142, %s139, 25
      %s144 = smul.addr %s141, 26
      %s145 = sadd.s32 %s143, %s144
      %s146 = smul.addr %s145, 4
      %s147 = scalar_lea.vmem %s0, %s146
      %p148 = pneg %p48
      %p149 = pneg %p45
      %p150 = pneg %p69
      %p151 = pneg %p66
      %p152 = pneg %p97
      %p153 = pneg %p94
      %s154 = smul.u32 26, %s18
      %p155 = scmp.lt.s32.totalorder %s17, 1
      %s156 = scalar_select %p155, %s17, 1
      %p157 = scmp.lt.s32.totalorder %s154, 25
      %s158 = scalar_select %p157, %s154, 25
      %s159 = smul.addr %s156, 26
      %s160 = sadd.s32 %s158, %s159
      %s161 = smul.addr %s160, 4
      %s162 = scalar_lea.vmem %s2, %s161
      %s163 = smul.u32 26, %s18
      %p164 = scmp.lt.s32.totalorder %s17, 1
      %s165 = scalar_select %p164, %s17, 1
      %p166 = scmp.lt.s32.totalorder %s163, 25
      %s167 = scalar_select %p166, %s163, 25
      %s168 = smul.addr %s165, 26
      %s169 = sadd.s32 %s167, %s168
      %s170 = smul.addr %s169, 4
      %s171 = scalar_lea.vmem %s0, %s170
      %s172 = smul.u32 26, %s18
      %s173 = smul.u32 26, %s18
      %p174 = scmp.lt.s32.totalorder %s17, 1
      %s175 = scalar_select %p174, %s17, 1
      %p176 = scmp.lt.s32.totalorder %s173, 25
      %s177 = scalar_select %p176, %s173, 25
      %s178 = smul.addr %s175, 26
      %s179 = sadd.s32 %s177, %s178
      %s180 = smul.addr %s179, 4
      %s181 = scalar_lea.vmem %s2, %s180
      %s182 = smul.u32 26, %s18
      %v184 = vld [vmem:[%s171] sm:$0xf]
      %v185 = vld [vmem:[%s171 + $0x4] sm:$0xf]
      %v186 = vld [vmem:[%s171 + $0x8] sm:$0xf]
      %v187 = vld [vmem:[%s171 + $0xc] sm:$0xf]
      %v188 = vld [vmem:[%s171 + $0x10] sm:$0xf]
      %v189 = vld [vmem:[%s171 + $0x14] sm:$0xf]
      %v190 = vld [vmem:[%s171 + $0x18] sm:$0xf]
      %v191 = vld [vmem:[%s171 + $0x1c] sm:$0xf]
      %v192 = vld [vmem:[%s171 + $0x20] sm:$0xf]
      %v193 = vld [vmem:[%s171 + $0x24] sm:$0xf]
      %v194 = vld [vmem:[%s171 + $0x28] sm:$0xf]
      %v195 = vld [vmem:[%s171 + $0x2c] sm:$0xf]
      %v196 = vld [vmem:[%s171 + $0x30] sm:$0xf]
      %v197 = vld [vmem:[%s171 + $0x34] sm:$0xf]
      %v198 = vld [vmem:[%s171 + $0x38] sm:$0xf]
      %v199 = vld [vmem:[%s171 + $0x3c] sm:$0xf]
      %v200 = vld [vmem:[%s171 + $0x40] sm:$0xf]
      %v201 = vld [vmem:[%s171 + $0x44] sm:$0xf]
      %v202 = vld [vmem:[%s171 + $0x48] sm:$0xf]
      %v203 = vld [vmem:[%s171 + $0x4c] sm:$0xf]
      %v204 = vld [vmem:[%s171 + $0x50] sm:$0xf]
      %v205 = vld [vmem:[%s171 + $0x54] sm:$0xf]
      %v206 = vld [vmem:[%s171 + $0x58] sm:$0xf]
      %v207 = vld [vmem:[%s171 + $0x5c] sm:$0xf]
      %v208 = vld [vmem:[%s171 + $0x60] sm:$0xf]
      %v209 = vld [vmem:[%s171 + $0x64] sm:$0xf]
      %v210 = vld [vmem:[%s1] sm:$0xf]
      %v211 = vld [vmem:[%s1 + $0x4] sm:$0xf]
      %v212 = vld [vmem:[%s1 + $0x8] sm:$0xf]
      %v213 = vld [vmem:[%s1 + $0xc] sm:$0xf]
      %v214 = vld [vmem:[%s1 + $0x10] sm:$0x3]
      %v241 = vunpack.c.l.b16 %v184
      %v242 = vunpack.c.l.b16 %v185
      %v243 = vunpack.c.l.b16 %v186
      %v244 = vunpack.c.l.b16 %v187
      %v245 = vunpack.c.l.b16 %v188
      %v246 = vunpack.c.l.b16 %v189
      %v247 = vunpack.c.l.b16 %v190
      %v248 = vunpack.c.l.b16 %v191
      %v249 = vunpack.c.l.b16 %v192
      %v250 = vunpack.c.l.b16 %v193
      %v251 = vunpack.c.l.b16 %v194
      %v252 = vunpack.c.l.b16 %v195
      %v253 = vunpack.c.l.b16 %v196
      %v254 = vunpack.c.l.b16 %v197
      %v255 = vunpack.c.l.b16 %v198
      %v256 = vunpack.c.l.b16 %v199
      %v257 = vunpack.c.l.b16 %v200
      %v258 = vunpack.c.l.b16 %v201
      %v259 = vunpack.c.l.b16 %v202
      %v260 = vunpack.c.l.b16 %v203
      %v261 = vunpack.c.l.b16 %v204
      %v262 = vunpack.c.l.b16 %v205
      %v263 = vunpack.c.l.b16 %v206
      %v264 = vunpack.c.l.b16 %v207
      %v265 = vunpack.c.l.b16 %v208
      %v266 = vunpack.c.l.b16 %v209
      %v267 = vpack.c.b16 %v242, %v241
      %v268 = vpack.c.b16 %v244, %v243
      %v269 = vpack.c.b16 %v246, %v245
      %v270 = vpack.c.b16 %v248, %v247
      %v271 = vpack.c.b16 %v250, %v249
      %v272 = vpack.c.b16 %v252, %v251
      %v273 = vpack.c.b16 %v254, %v253
      %v274 = vpack.c.b16 %v256, %v255
      %v275 = vpack.c.b16 %v258, %v257
      %v276 = vpack.c.b16 %v260, %v259
      %v277 = vpack.c.b16 %v262, %v261
      %v278 = vpack.c.b16 %v264, %v263
      %v279 = vpack.c.b16 %v266, %v265
      %v285 = vunpack.c.l.b16 %v210
      %v286 = vunpack.c.l.b16 %v211
      %v287 = vunpack.c.l.b16 %v212
      %v288 = vunpack.c.l.b16 %v213
      %v289 = vunpack.c.l.b16 %v214
      %v290 = vpack.c.b16 %v286, %v285
      %v291 = vpack.c.b16 %v288, %v287
      %v292 = vpack.c.b16 %v289, %v289
      %vm295 = vcmask 293888
      %v297 = vsel %vm295, %v267, 0
      %v300 = vsel %vm295, %v268, 0
      %v303 = vsel %vm295, %v269, 0
      %v306 = vsel %vm295, %v270, 0
      %v309 = vsel %vm295, %v271, 0
      %v312 = vsel %vm295, %v272, 0
      %v315 = vsel %vm295, %v273, 0
      %v318 = vsel %vm295, %v274, 0
      %v321 = vsel %vm295, %v275, 0
      %v324 = vsel %vm295, %v276, 0
      %v327 = vsel %vm295, %v277, 0
      %v330 = vsel %vm295, %v278, 0
      %v333 = vsel %vm295, %v279, 0
      %vm335 = vcmask 1041408
      %v337 = vsel %vm335, %v292, 0
      %339 = vmatpush.bf16.msra.mxu0 0
      %340 = vmatpush.bf16.msra.mxu0 0
      %341 = vmatpush.bf16.msra.mxu0 0
      %342 = vmatpush.bf16.msra.mxu0 0
      %343 = vmatpush.bf16.msra.mxu0 0
      %344 = vmatpush.bf16.msra.mxu0 %v337
      %345 = vmatpush.bf16.msra.mxu0 %v291
      %346 = vmatpush.bf16.msra.mxu0 %v290
      %347 = vmatmul.bf16.gmra.mxu0 %v297
      %v348 = vpop.f32.mrf.mxu0
      %v349 = vadd.f32 0.0, %v348
      %v350 = vpop.f32.mrf.mxu0
      %v351 = vadd.f32 0.0, %v350
      %352 = vmatmul.bf16.gmra.mxu0 %v300
      %v353 = vpop.f32.mrf.mxu0
      %v354 = vadd.f32 0.0, %v353
      %v355 = vpop.f32.mrf.mxu0
      %v356 = vadd.f32 0.0, %v355
      %357 = vmatmul.bf16.gmra.mxu0 %v303
      %v358 = vpop.f32.mrf.mxu0
      %v359 = vadd.f32 0.0, %v358
      %v360 = vpop.f32.mrf.mxu0
      %v361 = vadd.f32 0.0, %v360
      %362 = vmatmul.bf16.gmra.mxu0 %v306
      %v363 = vpop.f32.mrf.mxu0
      %v364 = vadd.f32 0.0, %v363
      %v365 = vpop.f32.mrf.mxu0
      %v366 = vadd.f32 0.0, %v365
      %367 = vmatmul.bf16.gmra.mxu0 %v309
      %v368 = vpop.f32.mrf.mxu0
      %v369 = vadd.f32 0.0, %v368
      %v370 = vpop.f32.mrf.mxu0
      %v371 = vadd.f32 0.0, %v370
      %372 = vmatmul.bf16.gmra.mxu0 %v312
      %v373 = vpop.f32.mrf.mxu0
      %v374 = vadd.f32 0.0, %v373
      %v375 = vpop.f32.mrf.mxu0
      %v376 = vadd.f32 0.0, %v375
      %377 = vmatmul.bf16.gmra.mxu0 %v315
      %v378 = vpop.f32.mrf.mxu0
      %v379 = vadd.f32 0.0, %v378
      %v380 = vpop.f32.mrf.mxu0
      %v381 = vadd.f32 0.0, %v380
      %382 = vmatmul.bf16.gmra.mxu0 %v318
      %v383 = vpop.f32.mrf.mxu0
      %v384 = vadd.f32 0.0, %v383
      %v385 = vpop.f32.mrf.mxu0
      %v386 = vadd.f32 0.0, %v385
      %387 = vmatmul.bf16.gmra.mxu0 %v321
      %v388 = vpop.f32.mrf.mxu0
      %v389 = vadd.f32 0.0, %v388
      %v390 = vpop.f32.mrf.mxu0
      %v391 = vadd.f32 0.0, %v390
      %392 = vmatmul.bf16.gmra.mxu0 %v324
      %v393 = vpop.f32.mrf.mxu0
      %v394 = vadd.f32 0.0, %v393
      %v395 = vpop.f32.mrf.mxu0
      %v396 = vadd.f32 0.0, %v395
      %397 = vmatmul.bf16.gmra.mxu0 %v327
      %v398 = vpop.f32.mrf.mxu0
      %v399 = vadd.f32 0.0, %v398
      %v400 = vpop.f32.mrf.mxu0
      %v401 = vadd.f32 0.0, %v400
      %402 = vmatmul.bf16.gmra.mxu0 %v330
      %v403 = vpop.f32.mrf.mxu0
      %v404 = vadd.f32 0.0, %v403
      %v405 = vpop.f32.mrf.mxu0
      %v406 = vadd.f32 0.0, %v405
      %407 = vmatmul.bf16.gmra.mxu0 %v333
      %v408 = vpop.f32.mrf.mxu0
      %v409 = vadd.f32 0.0, %v408
      %v410 = vpop.f32.mrf.mxu0
      %v411 = vadd.f32 0.0, %v410
      %412 = vdwg.mxu0
      %v413 = vpack.c.bf16 %v349, %v349
      %v414 = vpack.c.bf16 %v351, %v351
      %v415 = vpack.c.bf16 %v354, %v354
      %v416 = vpack.c.bf16 %v356, %v356
      %v417 = vpack.c.bf16 %v359, %v359
      %v418 = vpack.c.bf16 %v361, %v361
      %v419 = vpack.c.bf16 %v364, %v364
      %v420 = vpack.c.bf16 %v366, %v366
      %v421 = vpack.c.bf16 %v369, %v369
      %v422 = vpack.c.bf16 %v371, %v371
      %v423 = vpack.c.bf16 %v374, %v374
      %v424 = vpack.c.bf16 %v376, %v376
      %v425 = vpack.c.bf16 %v379, %v379
      %v426 = vpack.c.bf16 %v381, %v381
      %v427 = vpack.c.bf16 %v384, %v384
      %v428 = vpack.c.bf16 %v386, %v386
      %v429 = vpack.c.bf16 %v389, %v389
      %v430 = vpack.c.bf16 %v391, %v391
      %v431 = vpack.c.bf16 %v394, %v394
      %v432 = vpack.c.bf16 %v396, %v396
      %v433 = vpack.c.bf16 %v399, %v399
      %v434 = vpack.c.bf16 %v401, %v401
      %v435 = vpack.c.bf16 %v404, %v404
      %v436 = vpack.c.bf16 %v406, %v406
      %v437 = vpack.c.bf16 %v409, %v409
      %v438 = vpack.c.bf16 %v411, %v411
      %439 = vst [vmem:[%s181] sm:$0xf] %v413
      %440 = vst [vmem:[%s181 + $0x4] sm:$0xf] %v414
      %441 = vst [vmem:[%s181 + $0x8] sm:$0xf] %v415
      %442 = vst [vmem:[%s181 + $0xc] sm:$0xf] %v416
      %443 = vst [vmem:[%s181 + $0x10] sm:$0xf] %v417
      %444 = vst [vmem:[%s181 + $0x14] sm:$0xf] %v418
      %445 = vst [vmem:[%s181 + $0x18] sm:$0xf] %v419
      %446 = vst [vmem:[%s181 + $0x1c] sm:$0xf] %v420
      %447 = vst [vmem:[%s181 + $0x20] sm:$0xf] %v421
      %448 = vst [vmem:[%s181 + $0x24] sm:$0xf] %v422
      %449 = vst [vmem:[%s181 + $0x28] sm:$0xf] %v423
      %450 = vst [vmem:[%s181 + $0x2c] sm:$0xf] %v424
      %451 = vst [vmem:[%s181 + $0x30] sm:$0xf] %v425
      %452 = vst [vmem:[%s181 + $0x34] sm:$0xf] %v426
      %453 = vst [vmem:[%s181 + $0x38] sm:$0xf] %v427
      %454 = vst [vmem:[%s181 + $0x3c] sm:$0xf] %v428
      %455 = vst [vmem:[%s181 + $0x40] sm:$0xf] %v429
      %456 = vst [vmem:[%s181 + $0x44] sm:$0xf] %v430
      %457 = vst [vmem:[%s181 + $0x48] sm:$0xf] %v431
      %458 = vst [vmem:[%s181 + $0x4c] sm:$0xf] %v432
      %459 = vst [vmem:[%s181 + $0x50] sm:$0xf] %v433
      %460 = vst [vmem:[%s181 + $0x54] sm:$0xf] %v434
      %461 = vst [vmem:[%s181 + $0x58] sm:$0xf] %v435
      %462 = vst [vmem:[%s181 + $0x5c] sm:$0xf] %v436
      %463 = vst [vmem:[%s181 + $0x60] sm:$0xf] %v437
      %464 = vst [vmem:[%s181 + $0x64] sm:$0xf] %v438
      %s465 = smul.u32 26, %s18
      %p466 = scmp.lt.s32.totalorder %s17, 1
      %s467 = scalar_select %p466, %s17, 1
      %p468 = scmp.lt.s32.totalorder %s465, 25
      %s469 = scalar_select %p468, %s465, 25
      %s470 = smul.addr %s467, 26
      %s471 = sadd.s32 %s469, %s470
      %s472 = smul.addr %s471, 4
      %s473 = scalar_lea.vmem %s2, %s472
      // Predicated region
      $region29: #{qconv2d_forward.1} parent=27 // pred_check
        %p474 = pneg %p94
      $region30: #{qconv2d_forward.1} parent=27 // pred_check_branch
        %476 = sbr.rel (%p474) target = $region32
      $region31: #{qconv2d_forward.1} parent=27 // pred_region
        %s477 = smul.u32 26, %s18
      $region32: #{qconv2d_forward.1} parent=27 // pred_fallthru
        _
    $region28: #{qconv2d_forward.1} parent=5 // pred_fallthru
      _
    %p478 = scmp.le.s32.totalorder 2, %s8
    // Predicated region
    $region33: #{qconv2d_forward.1} parent=5 // pred_check
      %p479 = pneg %p478
    $region34: #{qconv2d_forward.1} parent=5 // pred_check_branch
      %481 = sbr.rel (%p479) target = $region36
    $region35: #{qconv2d_forward.1} parent=5 // pred_region
      %s482 = ssub.s32 %s8, 2
      // Predicated region
      $region37: #{qconv2d_forward.1} parent=35 // pred_check
        %p483 = pneg %p100
      $region38: #{qconv2d_forward.1} parent=35 // pred_check_branch
        %485 = sbr.rel (%p483) target = $region40
      $region39: #{qconv2d_forward.1} parent=35 // pred_region
        %s486 = smul.u32 26, %s20
        %p487 = scmp.lt.s32.totalorder %s19, 1
        %s488 = scalar_select %p487, %s19, 1
        %p489 = scmp.lt.s32.totalorder %s486, 25
        %s490 = scalar_select %p489, %s486, 25
        %s491 = smul.addr %s488, 26
        %s492 = sadd.s32 %s490, %s491
        %s493 = smul.addr %s492, 4
        %s494 = scalar_lea.vmem %s2, %s493
      $region40: #{qconv2d_forward.1} parent=35 // pred_fallthru
        _
    $region36: #{qconv2d_forward.1} parent=5 // pred_fallthru
      _
  $region6: #{qconv2d_forward.1} parent=0 // loop_footer
    %s12 = sadd.s32 1, %s8
  $region7: #{qconv2d_forward.1} parent=0 // loop_footer_branch
    %7 = sbr.rel target = $region3
  $region8: #{qconv2d_forward.1} parent=0 // loop_exit
    _

</llo_original>
